<compile_context>
chip_gen: v7x
topology: tpu7x:2x2x1
jax: 0.10.0
libtpu: 0.0.40
codegen_flags: <defaults>
</compile_context>

<pallas_src>
import math
import functools

import jax
import jax.numpy as jnp
from jax import lax
from jax.experimental import pallas as pl
from jax.experimental.pallas import tpu as pltpu


# ----------------------------- Fused Pallas kernel -----------------------------

def _fused_self_attend_kernel(x_ref, wqkv_ref, bqkv_ref, wproj_ref, bproj_ref,
                              o_ref, *, B, T, nhead, head_dim):
    """All batch elements in one shot: x (B*T, hidden) -> out (B*T, hidden)."""
    hidden = nhead * head_dim
    x = x_ref[...]                                                    # (B*T, hidden)

    # Fused QKV projection over ALL B*T rows: one MXU matmul.
    # (1/sqrt(head_dim) is already folded into the Q columns of wqkv/bqkv.)
    qkv = (jnp.dot(x, wqkv_ref[...], preferred_element_type=jnp.float32)
           + bqkv_ref[...])                                           # (B*T, 3*hidden)

    for b in range(B):                                                # static, B is tiny
        r0 = b * T                                                    # sublane-aligned (T=8)
        # Output projection folded in per head:
        #   concat_h(o_h) @ Wp^T == sum_h o_h @ Wp^T[h*D:(h+1)*D, :]
        # Accumulator starts at the broadcast proj bias (no zero-fill + late add).
        acc = jnp.broadcast_to(bproj_ref[...], (T, hidden)).astype(jnp.float32)
        for h in range(nhead):                                        # static, nhead is tiny
            q = qkv[r0:r0 + T, h * head_dim:(h + 1) * head_dim]                       # (T, D)
            k = qkv[r0:r0 + T, hidden + h * head_dim: hidden + (h + 1) * head_dim]    # (T, D)
            v = qkv[r0:r0 + T, 2 * hidden + h * head_dim: 2 * hidden + (h + 1) * head_dim]

            # q @ k^T without materializing a transpose (MXU-native contraction).
            s = lax.dot_general(q, k, (((1,), (1,)), ((), ())),
                                preferred_element_type=jnp.float32)   # (T, T)
            m = jnp.max(s, axis=-1, keepdims=True)
            p = jnp.exp(s - m)
            inv = pl.reciprocal(jnp.sum(p, axis=-1, keepdims=True), approx=True)
            p = p * inv                                               # softmax(dim=-1)

            o_h = jnp.dot(p, v, preferred_element_type=jnp.float32)   # (T, D)
            acc = acc + jnp.dot(o_h, wproj_ref[h * head_dim:(h + 1) * head_dim, :],
                                preferred_element_type=jnp.float32)   # (T, hidden)

        # proj_dropout is identity in eval mode.
        o_ref[r0:r0 + T, :] = acc.astype(o_ref.dtype)


# ----------------------------- Module wrapper -----------------------------

class Configs:
    hidden_dim = 32
    nhead = 2
    bias = True
    dropout = 0.0
    use_flash_attn = False
    max_blocksize = 64


def init_params(key, hidden, bias):
    keys = jax.random.split(key, 8)

    def lin(kw, kb):
        w = jax.random.normal(kw, (hidden, hidden), jnp.float32) * 0.02   # PyTorch (out, in)
        b = jax.random.normal(kb, (hidden,), jnp.float32) * 0.02
        return (w, b)

    params = {
        "query": lin(keys[0], keys[1]),
        "key": lin(keys[2], keys[3]),
        "value": lin(keys[4], keys[5]),
    }
    pw = jax.random.normal(keys[6], (hidden, hidden), jnp.float32) * 0.02
    pb = (jax.random.normal(keys[7], (hidden,), jnp.float32) * 0.02
          if bias else jnp.zeros((hidden,), jnp.float32))
    params["proj"] = (pw, pb)
    return params


def fuse_params(params, nhead):
    """Done ONCE: pre-transpose PyTorch (out,in) weights, concat Q/K/V and fold the
    1/sqrt(head_dim) attention scale into the Q columns (weight AND bias)."""
    wq, bq = params["query"]
    wk, bk = params["key"]
    wv, bv = params["value"]
    wp, bp = params["proj"]
    hidden = wq.shape[0]
    scale = 1.0 / math.sqrt(hidden // nhead)
    w_qkv_t = jnp.concatenate([wq.T * scale, wk.T, wv.T], axis=1)   # (hidden, 3*hidden)
    b_qkv = jnp.concatenate([bq * scale, bk, bv]).reshape(1, -1)    # (1, 3*hidden)
    w_proj_t = wp.T                                                 # (hidden, hidden)
    b_proj = bp.reshape(1, -1)                                      # (1, hidden)
    return w_qkv_t, b_qkv, w_proj_t, b_proj


def self_attend_forward(fused, x, nhead):
    """SelfAttend.get_qkv(x,x,x) + forward(q,k,v) (padding_mask=None, is_causal=False)."""
    w_qkv_t, b_qkv, w_proj_t, b_proj = fused
    B, T, hidden = x.shape
    head_dim = hidden // nhead
    x2 = x.reshape(B * T, hidden)                         # free layout reinterpretation
    kern = functools.partial(_fused_self_attend_kernel,
                             B=B, T=T, nhead=nhead, head_dim=head_dim)
    # Single invocation, single block: whole working set (<100 KiB) lives in VMEM.
    out = pl.pallas_call(
        kern,
        out_shape=jax.ShapeDtypeStruct((B * T, hidden), x.dtype),
    )(x2, w_qkv_t, b_qkv, w_proj_t, b_proj)
    return out.reshape(B, T, hidden)


# ----------------------------- Pure-JAX reference -----------------------------

def _reference(params, x, nhead):
    B, T, hidden = x.shape
    D = hidden // nhead

    def lin(p, z):
        return z @ p[0].T + p[1]

    def heads(z):
        return jnp.transpose(z.reshape(B, T, nhead, D), (0, 2, 1, 3))

    q = heads(lin(params["query"], x))
    k = heads(lin(params["key"], x))
    v = heads(lin(params["value"], x))
    s = jnp.einsum("bhqd,bhkd->bhqk", q, k) * (1.0 / math.sqrt(D))
    p = jax.nn.softmax(s, axis=-1)
    o = jnp.einsum("bhqk,bhkd->bhqd", p, v)
    o = jnp.transpose(o, (0, 2, 1, 3)).reshape(B, T, hidden)
    return o @ params["proj"][0].T + params["proj"][1]


if __name__ == "__main__":
    cfg = Configs()
    key = jax.random.PRNGKey(0)
    kx, kp = jax.random.split(key)

    B, T, hidden = 2, 8, cfg.hidden_dim
    x = jax.random.normal(kx, (B, T, hidden), jnp.float32)
    params = init_params(kp, hidden, cfg.bias)
    fused = fuse_params(params, cfg.nhead)

    out = self_attend_forward(fused, x, cfg.nhead)              # (B, T, hidden)
    jax.block_until_ready(out)

    assert out.shape == (B, T, hidden), out.shape
    assert bool(jnp.all(jnp.isfinite(out)))

    ref = _reference(params, x, cfg.nhead)
    max_err = float(jnp.max(jnp.abs(out - ref)))
    assert bool(jnp.allclose(out, ref, rtol=1e-2, atol=1e-2)), max_err

    print("KERNEL_OK")
</pallas_src>

<mosaic_0001>
module attributes {stable_mosaic.version = 11 : i64} {
  func.func @_fused_self_attend_kernel(%arg0: memref<16x32xf32, #tpu.memory_space<vmem>>, %arg1: memref<32x96xf32, #tpu.memory_space<vmem>>, %arg2: memref<1x96xf32, #tpu.memory_space<vmem>>, %arg3: memref<32x32xf32, #tpu.memory_space<vmem>>, %arg4: memref<1x32xf32, #tpu.memory_space<vmem>>, %arg5: memref<16x32xf32, #tpu.memory_space<vmem>>) attributes {dimension_semantics = [], scalar_prefetch = 0 : i64, scratch_operands = 0 : i64, tpu.core_type = #tpu.core_type<tc>} {
    %c0 = arith.constant 0 : index
    %c0_0 = arith.constant 0 : index
    %0 = vector.load %arg0[%c0, %c0_0] : memref<16x32xf32, #tpu.memory_space<vmem>>, vector<16x32xf32>
    %c0_1 = arith.constant 0 : index
    %c0_2 = arith.constant 0 : index
    %1 = vector.load %arg1[%c0_1, %c0_2] : memref<32x96xf32, #tpu.memory_space<vmem>>, vector<32x96xf32>
    %cst = arith.constant dense<0.000000e+00> : vector<16x96xf32>
    %2 = tpu.matmul %0, %1, %cst {dimension_numbers = #tpu.dot_dimension_numbers<[1], [0], [0], [1], [0, 0, 1, 1], [], []>} : vector<16x32xf32>, vector<32x96xf32>, vector<16x96xf32> -> vector<16x96xf32>
    %c0_3 = arith.constant 0 : index
    %c0_4 = arith.constant 0 : index
    %3 = vector.load %arg2[%c0_3, %c0_4] : memref<1x96xf32, #tpu.memory_space<vmem>>, vector<1x96xf32>
    %4 = vector.broadcast %3 : vector<1x96xf32> to vector<16x96xf32>
    %5 = arith.addf %2, %4 : vector<16x96xf32>
    %c0_5 = arith.constant 0 : index
    %c0_6 = arith.constant 0 : index
    %6 = vector.load %arg4[%c0_5, %c0_6] : memref<1x32xf32, #tpu.memory_space<vmem>>, vector<1x32xf32>
    %7 = vector.shape_cast %6 : vector<1x32xf32> to vector<1x32xf32>
    %8 = vector.broadcast %7 : vector<1x32xf32> to vector<8x32xf32>
    %9 = vector.extract_strided_slice %5 {offsets = [0, 0], sizes = [8, 16], strides = [1, 1]} : vector<16x96xf32> to vector<8x16xf32>
    %10 = vector.extract_strided_slice %5 {offsets = [0, 32], sizes = [8, 16], strides = [1, 1]} : vector<16x96xf32> to vector<8x16xf32>
    %11 = vector.extract_strided_slice %5 {offsets = [0, 64], sizes = [8, 16], strides = [1, 1]} : vector<16x96xf32> to vector<8x16xf32>
    %cst_7 = arith.constant dense<0.000000e+00> : vector<8x8xf32>
    %12 = tpu.matmul %9, %10, %cst_7 {dimension_numbers = #tpu.dot_dimension_numbers<[1], [1], [0], [0], [0, 0, 1, 0], [], []>} : vector<8x16xf32>, vector<8x16xf32>, vector<8x8xf32> -> vector<8x8xf32>
    %cst_8 = arith.constant dense<0xFF800000> : vector<8xf32>
    %13 = vector.multi_reduction <maximumf>, %12, %cst_8 [1] : vector<8x8xf32> to vector<8xf32>
    %14 = vector.shape_cast %13 : vector<8xf32> to vector<8x1xf32>
    %15 = vector.broadcast %14 : vector<8x1xf32> to vector<8x8xf32>
    %16 = arith.subf %12, %15 : vector<8x8xf32>
    %17 = math.exp %16 : vector<8x8xf32>
    %cst_9 = arith.constant dense<0.000000e+00> : vector<8xf32>
    %18 = vector.multi_reduction <add>, %17, %cst_9 [1] : vector<8x8xf32> to vector<8xf32>
    %19 = vector.shape_cast %18 : vector<8xf32> to vector<8x1xf32>
    %20 = tpu.reciprocal %19 {approx = true} : vector<8x1xf32> -> vector<8x1xf32>
    %21 = vector.broadcast %20 : vector<8x1xf32> to vector<8x8xf32>
    %22 = arith.mulf %17, %21 : vector<8x8xf32>
    %cst_10 = arith.constant dense<0.000000e+00> : vector<8x16xf32>
    %23 = tpu.matmul %22, %11, %cst_10 {dimension_numbers = #tpu.dot_dimension_numbers<[1], [0], [0], [1], [0, 0, 1, 1], [], []>} : vector<8x8xf32>, vector<8x16xf32>, vector<8x16xf32> -> vector<8x16xf32>
    %c0_11 = arith.constant 0 : index
    %c0_12 = arith.constant 0 : index
    %24 = vector.load %arg3[%c0_11, %c0_12] : memref<32x32xf32, #tpu.memory_space<vmem>>, vector<16x32xf32>
    %cst_13 = arith.constant dense<0.000000e+00> : vector<8x32xf32>
    %25 = tpu.matmul %23, %24, %cst_13 {dimension_numbers = #tpu.dot_dimension_numbers<[1], [0], [0], [1], [0, 0, 1, 1], [], []>} : vector<8x16xf32>, vector<16x32xf32>, vector<8x32xf32> -> vector<8x32xf32>
    %26 = arith.addf %8, %25 : vector<8x32xf32>
    %27 = vector.extract_strided_slice %5 {offsets = [0, 16], sizes = [8, 16], strides = [1, 1]} : vector<16x96xf32> to vector<8x16xf32>
    %28 = vector.extract_strided_slice %5 {offsets = [0, 48], sizes = [8, 16], strides = [1, 1]} : vector<16x96xf32> to vector<8x16xf32>
    %29 = vector.extract_strided_slice %5 {offsets = [0, 80], sizes = [8, 16], strides = [1, 1]} : vector<16x96xf32> to vector<8x16xf32>
    %cst_14 = arith.constant dense<0.000000e+00> : vector<8x8xf32>
    %30 = tpu.matmul %27, %28, %cst_14 {dimension_numbers = #tpu.dot_dimension_numbers<[1], [1], [0], [0], [0, 0, 1, 0], [], []>} : vector<8x16xf32>, vector<8x16xf32>, vector<8x8xf32> -> vector<8x8xf32>
    %cst_15 = arith.constant dense<0xFF800000> : vector<8xf32>
    %31 = vector.multi_reduction <maximumf>, %30, %cst_15 [1] : vector<8x8xf32> to vector<8xf32>
    %32 = vector.shape_cast %31 : vector<8xf32> to vector<8x1xf32>
    %33 = vector.broadcast %32 : vector<8x1xf32> to vector<8x8xf32>
    %34 = arith.subf %30, %33 : vector<8x8xf32>
    %35 = math.exp %34 : vector<8x8xf32>
    %cst_16 = arith.constant dense<0.000000e+00> : vector<8xf32>
    %36 = vector.multi_reduction <add>, %35, %cst_16 [1] : vector<8x8xf32> to vector<8xf32>
    %37 = vector.shape_cast %36 : vector<8xf32> to vector<8x1xf32>
    %38 = tpu.reciprocal %37 {approx = true} : vector<8x1xf32> -> vector<8x1xf32>
    %39 = vector.broadcast %38 : vector<8x1xf32> to vector<8x8xf32>
    %40 = arith.mulf %35, %39 : vector<8x8xf32>
    %cst_17 = arith.constant dense<0.000000e+00> : vector<8x16xf32>
    %41 = tpu.matmul %40, %29, %cst_17 {dimension_numbers = #tpu.dot_dimension_numbers<[1], [0], [0], [1], [0, 0, 1, 1], [], []>} : vector<8x8xf32>, vector<8x16xf32>, vector<8x16xf32> -> vector<8x16xf32>
    %c16 = arith.constant 16 : index
    %c0_18 = arith.constant 0 : index
    %42 = vector.load %arg3[%c16, %c0_18] : memref<32x32xf32, #tpu.memory_space<vmem>>, vector<16x32xf32>
    %cst_19 = arith.constant dense<0.000000e+00> : vector<8x32xf32>
    %43 = tpu.matmul %41, %42, %cst_19 {dimension_numbers = #tpu.dot_dimension_numbers<[1], [0], [0], [1], [0, 0, 1, 1], [], []>} : vector<8x16xf32>, vector<16x32xf32>, vector<8x32xf32> -> vector<8x32xf32>
    %44 = arith.addf %26, %43 : vector<8x32xf32>
    %c0_20 = arith.constant 0 : index
    %c0_21 = arith.constant 0 : index
    %45 = vector.load %arg5[%c0_20, %c0_21] : memref<16x32xf32, #tpu.memory_space<vmem>>, vector<8x32xf32>
    tpu.vector_store %arg5[%c0_20, %c0_21], %44 {strides = array<i32>} : memref<16x32xf32, #tpu.memory_space<vmem>>, vector<8x32xf32>,
    %c0_22 = arith.constant 0 : index
    %c0_23 = arith.constant 0 : index
    %46 = vector.load %arg4[%c0_22, %c0_23] : memref<1x32xf32, #tpu.memory_space<vmem>>, vector<1x32xf32>
    %47 = vector.shape_cast %46 : vector<1x32xf32> to vector<1x32xf32>
    %48 = vector.broadcast %47 : vector<1x32xf32> to vector<8x32xf32>
    %49 = vector.extract_strided_slice %5 {offsets = [8, 0], sizes = [8, 16], strides = [1, 1]} : vector<16x96xf32> to vector<8x16xf32>
    %50 = vector.extract_strided_slice %5 {offsets = [8, 32], sizes = [8, 16], strides = [1, 1]} : vector<16x96xf32> to vector<8x16xf32>
    %51 = vector.extract_strided_slice %5 {offsets = [8, 64], sizes = [8, 16], strides = [1, 1]} : vector<16x96xf32> to vector<8x16xf32>
    %cst_24 = arith.constant dense<0.000000e+00> : vector<8x8xf32>
    %52 = tpu.matmul %49, %50, %cst_24 {dimension_numbers = #tpu.dot_dimension_numbers<[1], [1], [0], [0], [0, 0, 1, 0], [], []>} : vector<8x16xf32>, vector<8x16xf32>, vector<8x8xf32> -> vector<8x8xf32>
    %cst_25 = arith.constant dense<0xFF800000> : vector<8xf32>
    %53 = vector.multi_reduction <maximumf>, %52, %cst_25 [1] : vector<8x8xf32> to vector<8xf32>
    %54 = vector.shape_cast %53 : vector<8xf32> to vector<8x1xf32>
    %55 = vector.broadcast %54 : vector<8x1xf32> to vector<8x8xf32>
    %56 = arith.subf %52, %55 : vector<8x8xf32>
    %57 = math.exp %56 : vector<8x8xf32>
    %cst_26 = arith.constant dense<0.000000e+00> : vector<8xf32>
    %58 = vector.multi_reduction <add>, %57, %cst_26 [1] : vector<8x8xf32> to vector<8xf32>
    %59 = vector.shape_cast %58 : vector<8xf32> to vector<8x1xf32>
    %60 = tpu.reciprocal %59 {approx = true} : vector<8x1xf32> -> vector<8x1xf32>
    %61 = vector.broadcast %60 : vector<8x1xf32> to vector<8x8xf32>
    %62 = arith.mulf %57, %61 : vector<8x8xf32>
    %cst_27 = arith.constant dense<0.000000e+00> : vector<8x16xf32>
    %63 = tpu.matmul %62, %51, %cst_27 {dimension_numbers = #tpu.dot_dimension_numbers<[1], [0], [0], [1], [0, 0, 1, 1], [], []>} : vector<8x8xf32>, vector<8x16xf32>, vector<8x16xf32> -> vector<8x16xf32>
    %c0_28 = arith.constant 0 : index
    %c0_29 = arith.constant 0 : index
    %64 = vector.load %arg3[%c0_28, %c0_29] : memref<32x32xf32, #tpu.memory_space<vmem>>, vector<16x32xf32>
    %cst_30 = arith.constant dense<0.000000e+00> : vector<8x32xf32>
    %65 = tpu.matmul %63, %64, %cst_30 {dimension_numbers = #tpu.dot_dimension_numbers<[1], [0], [0], [1], [0, 0, 1, 1], [], []>} : vector<8x16xf32>, vector<16x32xf32>, vector<8x32xf32> -> vector<8x32xf32>
    %66 = arith.addf %48, %65 : vector<8x32xf32>
    %67 = vector.extract_strided_slice %5 {offsets = [8, 16], sizes = [8, 16], strides = [1, 1]} : vector<16x96xf32> to vector<8x16xf32>
    %68 = vector.extract_strided_slice %5 {offsets = [8, 48], sizes = [8, 16], strides = [1, 1]} : vector<16x96xf32> to vector<8x16xf32>
    %69 = vector.extract_strided_slice %5 {offsets = [8, 80], sizes = [8, 16], strides = [1, 1]} : vector<16x96xf32> to vector<8x16xf32>
    %cst_31 = arith.constant dense<0.000000e+00> : vector<8x8xf32>
    %70 = tpu.matmul %67, %68, %cst_31 {dimension_numbers = #tpu.dot_dimension_numbers<[1], [1], [0], [0], [0, 0, 1, 0], [], []>} : vector<8x16xf32>, vector<8x16xf32>, vector<8x8xf32> -> vector<8x8xf32>
    %cst_32 = arith.constant dense<0xFF800000> : vector<8xf32>
    %71 = vector.multi_reduction <maximumf>, %70, %cst_32 [1] : vector<8x8xf32> to vector<8xf32>
    %72 = vector.shape_cast %71 : vector<8xf32> to vector<8x1xf32>
    %73 = vector.broadcast %72 : vector<8x1xf32> to vector<8x8xf32>
    %74 = arith.subf %70, %73 : vector<8x8xf32>
    %75 = math.exp %74 : vector<8x8xf32>
    %cst_33 = arith.constant dense<0.000000e+00> : vector<8xf32>
    %76 = vector.multi_reduction <add>, %75, %cst_33 [1] : vector<8x8xf32> to vector<8xf32>
    %77 = vector.shape_cast %76 : vector<8xf32> to vector<8x1xf32>
    %78 = tpu.reciprocal %77 {approx = true} : vector<8x1xf32> -> vector<8x1xf32>
    %79 = vector.broadcast %78 : vector<8x1xf32> to vector<8x8xf32>
    %80 = arith.mulf %75, %79 : vector<8x8xf32>
    %cst_34 = arith.constant dense<0.000000e+00> : vector<8x16xf32>
    %81 = tpu.matmul %80, %69, %cst_34 {dimension_numbers = #tpu.dot_dimension_numbers<[1], [0], [0], [1], [0, 0, 1, 1], [], []>} : vector<8x8xf32>, vector<8x16xf32>, vector<8x16xf32> -> vector<8x16xf32>
    %c16_35 = arith.constant 16 : index
    %c0_36 = arith.constant 0 : index
    %82 = vector.load %arg3[%c16_35, %c0_36] : memref<32x32xf32, #tpu.memory_space<vmem>>, vector<16x32xf32>
    %cst_37 = arith.constant dense<0.000000e+00> : vector<8x32xf32>
    %83 = tpu.matmul %81, %82, %cst_37 {dimension_numbers = #tpu.dot_dimension_numbers<[1], [0], [0], [1], [0, 0, 1, 1], [], []>} : vector<8x16xf32>, vector<16x32xf32>, vector<8x32xf32> -> vector<8x32xf32>
    %84 = arith.addf %66, %83 : vector<8x32xf32>
    %c8 = arith.constant 8 : index
    %c0_38 = arith.constant 0 : index
    %85 = vector.load %arg5[%c8, %c0_38] : memref<16x32xf32, #tpu.memory_space<vmem>>, vector<8x32xf32>
    tpu.vector_store %arg5[%c8, %c0_38], %84 {strides = array<i32>} : memref<16x32xf32, #tpu.memory_space<vmem>>, vector<8x32xf32>,
    return
  }
}

</mosaic_0001>

<llo_original>
// kernel: tpu_custom_call.1
$region0: #{tpu_custom_call.1}
  #allocation0 [shape = 'u32[]', space=smem, size = 0x4, offset = 0x4, fixed_abs, tag = 'smem constant byte address 0x4 - core index']
  #allocation1 [shape = 'u32[144,128]{1,0:T(1,128)}', space=vmem, size = 0x12000, scoped, tag = 'internal scratch']
  %s0 = inlined_call_operand.hbm [shape: f32[16,32], index: 0, kind: input, shape index: {}]
  %s1 = inlined_call_operand.hbm [shape: f32[32,96], index: 1, kind: input, shape index: {}]
  %s2 = inlined_call_operand.vmem [shape: f32[1,96], index: 2, kind: input, shape index: {}]
  %s3 = inlined_call_operand.hbm [shape: f32[32,32], index: 3, kind: input, shape index: {}]
  %s4 = inlined_call_operand.vmem [shape: f32[1,32], index: 4, kind: input, shape index: {}]
  %s5 = inlined_call_operand.hbm [shape: f32[16,32], index: 5, kind: output, shape index: {}]
  %s6 = sld [smem:[#allocation0]]
  $region42: #{tpu_custom_call.1} parent=0
    _
  %s8 = ssub.s32 1, %s6
  %s9 = scalar_select 0, %s8, %s6
  $region1: #{tpu_custom_call.1} parent=0
    #allocation2 [shape = 'u8[8192]{0}', space=vmem, size = 0x2000, scoped, tag = 'input window, operand 0, single buffered']
    #allocation3 [shape = 's32[1]{0}', space=sflag, size = 0x4, scoped, tag = 'scoped memory for tpu_custom_call.1']
    #allocation4 [shape = 's32[1]{0}', space=sflag, size = 0x4, scoped, tag = 'scoped memory for tpu_custom_call.1']
    #allocation5 [shape = 'u8[16384]{0}', space=vmem, size = 0x4000, scoped, tag = 'input window, operand 1, single buffered']
    #allocation6 [shape = 's32[1]{0}', space=sflag, size = 0x4, scoped, tag = 'scoped memory for tpu_custom_call.1']
    #allocation7 [shape = 'u8[16384]{0}', space=vmem, size = 0x4000, scoped, tag = 'input window, operand 3, single buffered']
    #allocation8 [shape = 'u8[8192]{0}', space=vmem, size = 0x2000, scoped, tag = 'output window, operand 0, single buffered']
    %10 = vsyncpa [#allocation3], 0
    %11 = vsyncpa [#allocation6], 0
    %12 = vsyncpa [#allocation4], 0
    // Predicated region
    $region2: #{tpu_custom_call.1} parent=1 // pred_check
      _
    $region3: #{tpu_custom_call.1} parent=1 // pred_check_branch
      %14 = sbr.rel (0) target = $region5
    $region4: #{tpu_custom_call.1} parent=1 // pred_region
      %s16 = ssub.s32 256, 256
      %17 = vsyncadd [#allocation3], %s16
      %s18 = sshll.u32 [#allocation2], 4
      %s19 = int_to_ptr.vmem [resolvable:$true] %s18
      %24 = dma.hbm_to_vmem [thread:$0]  %s0, 256, %s19, [#allocation3], 128, 128, 8
    $region5: #{tpu_custom_call.1} parent=1 // pred_fallthru
      _
    // Predicated region
    $region6: #{tpu_custom_call.1} parent=1 // pred_check
      _
    $region7: #{tpu_custom_call.1} parent=1 // pred_check_branch
      %26 = sbr.rel (0) target = $region9
    $region8: #{tpu_custom_call.1} parent=1 // pred_region
      %s28 = ssub.s32 512, 512
      %29 = vsyncadd [#allocation6], %s28
      %s30 = sshll.u32 [#allocation5], 4
      %s31 = int_to_ptr.vmem [resolvable:$true] %s30
      %36 = dma.hbm_to_vmem [thread:$0]  %s1, 512, %s31, [#allocation6], 128, 128, 8
    $region9: #{tpu_custom_call.1} parent=1 // pred_fallthru
      _
    // Predicated region
    $region10: #{tpu_custom_call.1} parent=1 // pred_check
      _
    $region11: #{tpu_custom_call.1} parent=1 // pred_check_branch
      %38 = sbr.rel (0) target = $region13
    $region12: #{tpu_custom_call.1} parent=1 // pred_region
      _
    $region13: #{tpu_custom_call.1} parent=1 // pred_fallthru
      _
    // Predicated region
    $region14: #{tpu_custom_call.1} parent=1 // pred_check
      _
    $region15: #{tpu_custom_call.1} parent=1 // pred_check_branch
      %40 = sbr.rel (0) target = $region17
    $region16: #{tpu_custom_call.1} parent=1 // pred_region
      %s42 = ssub.s32 512, 512
      %43 = vsyncadd [#allocation6], %s42
      %s44 = sshll.u32 [#allocation7], 4
      %s45 = int_to_ptr.vmem [resolvable:$true] %s44
      %50 = dma.hbm_to_vmem [thread:$0]  %s3, 512, %s45, [#allocation6], 128, 128, 8
    $region17: #{tpu_custom_call.1} parent=1 // pred_fallthru
      _
    // Predicated region
    $region18: #{tpu_custom_call.1} parent=1 // pred_check
      _
    $region19: #{tpu_custom_call.1} parent=1 // pred_check_branch
      %52 = sbr.rel (0) target = $region21
    $region20: #{tpu_custom_call.1} parent=1 // pred_region
      _
    $region21: #{tpu_custom_call.1} parent=1 // pred_fallthru
      _
    // Predicated region
    $region22: #{tpu_custom_call.1} parent=1 // pred_check
      _
    $region23: #{tpu_custom_call.1} parent=1 // pred_check_branch
      %54 = sbr.rel (0) target = $region25
    $region24: #{tpu_custom_call.1} parent=1 // pred_region
      %55 = dma.done [#allocation3], 256
    $region25: #{tpu_custom_call.1} parent=1 // pred_fallthru
      _
    // Predicated region
    $region26: #{tpu_custom_call.1} parent=1 // pred_check
      _
    $region27: #{tpu_custom_call.1} parent=1 // pred_check_branch
      %57 = sbr.rel (0) target = $region29
    $region28: #{tpu_custom_call.1} parent=1 // pred_region
      %58 = dma.done [#allocation6], 512
    $region29: #{tpu_custom_call.1} parent=1 // pred_fallthru
      _
    // Predicated region
    $region30: #{tpu_custom_call.1} parent=1 // pred_check
      _
    $region31: #{tpu_custom_call.1} parent=1 // pred_check_branch
      %60 = sbr.rel (0) target = $region33
    $region32: #{tpu_custom_call.1} parent=1 // pred_region
      %61 = dma.done [#allocation6], 512
    $region33: #{tpu_custom_call.1} parent=1 // pred_fallthru
      _
    %v62 = vld [vmem:[#allocation2] sm:$0xff]
    %v63 = vld [vmem:[#allocation2 + $0x8] sm:$0xff]
    %v64 = vld [vmem:[#allocation5] sm:$0xff]
    %v65 = vld [vmem:[#allocation5 + $0x8] sm:$0xff]
    %v66 = vld [vmem:[#allocation5 + $0x10] sm:$0xff]
    %v67 = vld [vmem:[#allocation5 + $0x18] sm:$0xff]
    %v68 = vld [vmem:[%s2] sm:$0x1]
    %v70 = vlaneseq
    %v71 = vshrl.u32 %v70, 7
    %v72 = vsub.s32 0, %v71
    %v73 = vrot.slane %v68, %v72
    %vm75 = vcmask 261120
    %v77 = vsel %vm75, %v62, 0
    %v80 = vsel %vm75, %v63, 0
    %82 = vmatprep.subr.mxu0 0.0
    %83 = vmatpush1.msra.mxu0 %v64
    %84 = vmatprep.subr.mxu0 0.0
    %85 = vmatpush1.msra.mxu0 %v65
    %86 = vmatprep.subr.mxu0 0.0
    %87 = vmatpush1.msra.mxu0 %v66
    %88 = vmatprep.subr.mxu0 0.0
    %89 = vmatpush1.msra.mxu0 %v67
    %90 = vmatprep.subr.mxu0 0.0
    %91 = vmatpush1.msra.mxu0 0.0
    %92 = vmatprep.subr.mxu0 0.0
    %93 = vmatpush1.msra.mxu0 0.0
    %94 = vmatprep.subr.mxu0 0.0
    %95 = vmatpush1.msra.mxu0 0.0
    %96 = vmatprep.subr.mxu0 0.0
    %97 = vmatpush1.msra.mxu0 0.0
    %98 = vmatprep.subr.mxu0 0.0
    %99 = vmatpush1.msra.mxu0 0.0
    %100 = vmatprep.subr.mxu0 0.0
    %101 = vmatpush1.msra.mxu0 0.0
    %102 = vmatprep.subr.mxu0 0.0
    %103 = vmatpush1.msra.mxu0 0.0
    %104 = vmatprep.subr.mxu0 0.0
    %105 = vmatpush1.msra.mxu0 0.0
    %106 = vmatprep.subr.mxu0 0.0
    %107 = vmatpush1.msra.mxu0 0.0
    %108 = vmatprep.subr.mxu0 0.0
    %109 = vmatpush1.msra.mxu0 0.0
    %110 = vmatprep.subr.mxu0 0.0
    %111 = vmatpush1.msra.mxu0 0.0
    %112 = vmatprep.subr.mxu0 0.0
    %113 = vmatpush1.msra.mxu0 0.0
    %114 = vmatprep.subr.mxu0 0.0
    %115 = vmatpush1.msra.mxu0 0.0
    %116 = vmatprep.subr.mxu0 0.0
    %117 = vmatpush1.msra.mxu0 0.0
    %118 = vmatprep.subr.mxu0 0.0
    %119 = vmatpush1.msra.mxu0 0.0
    %120 = vmatprep.subr.mxu0 0.0
    %121 = vmatpush1.msra.mxu0 0.0
    %122 = vmatprep.subr.mxu0 0.0
    %123 = vmatpush1.msra.mxu0 0.0
    %124 = vmatprep.subr.mxu0 0.0
    %125 = vmatpush1.msra.mxu0 0.0
    %126 = vmatprep.subr.mxu0 0.0
    %127 = vmatpush1.msra.mxu0 0.0
    %128 = vmatprep.subr.mxu0 0.0
    %129 = vmatpush1.msra.mxu0 0.0
    %130 = vmatprep.subr.mxu0 0.0
    %131 = vmatpush1.msra.mxu0 0.0
    %132 = vmatprep.subr.mxu0 0.0
    %133 = vmatpush1.msra.mxu0 0.0
    %134 = vmatprep.subr.mxu0 0.0
    %135 = vmatpush1.msra.mxu0 0.0
    %136 = vmatprep.subr.mxu0 0.0
    %137 = vmatpush1.msra.mxu0 0.0
    %138 = vmatprep.subr.mxu0 0.0
    %139 = vmatpush1.msra.mxu0 0.0
    %140 = vmatprep.subr.mxu0 0.0
    %141 = vmatpush1.msra.mxu0 0.0
    %142 = vmatprep.subr.mxu0 0.0
    %143 = vmatpush1.msra.mxu0 0.0
    %144 = vmatprep.subr.mxu0 0.0
    %145 = vmatpush1.msra.mxu0 0.0
    %146 = vmatprep.mubr.f32.mxu0 0.0
    %147 = vmatmul.mubr.f32.gmra.mrb[0].mxu0 %v77
    %v148 = vpop.f32.mrb[0].mxu0
    %v149 = vadd.f32 %v73, %v148
    %v150 = vpop.f32.mrb[0].mxu0
    %151 = vmatprep.mubr.f32.mxu0 0.0
    %152 = vmatmul.mubr.f32.gmra.mrb[0].mxu0 %v80
    %v153 = vpop.f32.mrb[0].mxu0
    %v154 = vadd.f32 %v73, %v153
    %v155 = vpop.f32.mrb[0].mxu0
    %156 = vdwg.mxu0
    %v157 = vld [vmem:[%s4] sm:$0x1]
    %v159 = vlaneseq
    %v160 = vshrl.u32 %v159, 7
    %v161 = vsub.s32 0, %v160
    %v162 = vrot.slane %v157, %v161
    %165 = vrot.lane.b32.xlu0 %v149, 96
    %v166 = vpop.permute.xlu0 %165
    %vm167 = vcmask 130048
    %v168 = vsel %vm167, %v149, 0
    %v170 = vsel %vm167, %v166, 0
    %172 = vmatprep.subr.mxu0 0.0
    %173 = vmatpush1.xpose.msra.mxu0 %v170
    %174 = vmatprep.subr.mxu0 0.0
    %175 = vmatpush1.xpose.msra.mxu0 0.0
    %176 = vmatprep.subr.mxu0 0.0
    %177 = vmatpush1.xpose.msra.mxu0 0.0
    %178 = vmatprep.subr.mxu0 0.0
    %179 = vmatpush1.xpose.msra.mxu0 0.0
    %180 = vmatprep.subr.mxu0 0.0
    %181 = vmatpush1.xpose.msra.mxu0 0.0
    %182 = vmatprep.subr.mxu0 0.0
    %183 = vmatpush1.xpose.msra.mxu0 0.0
    %184 = vmatprep.subr.mxu0 0.0
    %185 = vmatpush1.xpose.msra.mxu0 0.0
    %186 = vmatprep.subr.mxu0 0.0
    %187 = vmatpush1.xpose.msra.mxu0 0.0
    %188 = vmatprep.subr.mxu0 0.0
    %189 = vmatpush1.xpose.msra.mxu0 0.0
    %190 = vmatprep.subr.mxu0 0.0
    %191 = vmatpush1.xpose.msra.mxu0 0.0
    %192 = vmatprep.subr.mxu0 0.0
    %193 = vmatpush1.xpose.msra.mxu0 0.0
    %194 = vmatprep.subr.mxu0 0.0
    %195 = vmatpush1.xpose.msra.mxu0 0.0
    %196 = vmatprep.subr.mxu0 0.0
    %197 = vmatpush1.xpose.msra.mxu0 0.0
    %198 = vmatprep.subr.mxu0 0.0
    %199 = vmatpush1.xpose.msra.mxu0 0.0
    %200 = vmatprep.subr.mxu0 0.0
    %201 = vmatpush1.xpose.msra.mxu0 0.0
    %202 = vmatprep.subr.mxu0 0.0
    %203 = vmatpush1.xpose.msra.mxu0 0.0
    %204 = vmatprep.subr.mxu0 0.0
    %205 = vmatpush1.xpose.msra.mxu0 0.0
    %206 = vmatprep.subr.mxu0 0.0
    %207 = vmatpush1.xpose.msra.mxu0 0.0
    %208 = vmatprep.subr.mxu0 0.0
    %209 = vmatpush1.xpose.msra.mxu0 0.0
    %210 = vmatprep.subr.mxu0 0.0
    %211 = vmatpush1.xpose.msra.mxu0 0.0
    %212 = vmatprep.subr.mxu0 0.0
    %213 = vmatpush1.xpose.msra.mxu0 0.0
    %214 = vmatprep.subr.mxu0 0.0
    %215 = vmatpush1.xpose.msra.mxu0 0.0
    %216 = vmatprep.subr.mxu0 0.0
    %217 = vmatpush1.xpose.msra.mxu0 0.0
    %218 = vmatprep.subr.mxu0 0.0
    %219 = vmatpush1.xpose.msra.mxu0 0.0
    %220 = vmatprep.subr.mxu0 0.0
    %221 = vmatpush1.xpose.msra.mxu0 0.0
    %222 = vmatprep.subr.mxu0 0.0
    %223 = vmatpush1.xpose.msra.mxu0 0.0
    %224 = vmatprep.subr.mxu0 0.0
    %225 = vmatpush1.xpose.msra.mxu0 0.0
    %226 = vmatprep.subr.mxu0 0.0
    %227 = vmatpush1.xpose.msra.mxu0 0.0
    %228 = vmatprep.subr.mxu0 0.0
    %229 = vmatpush1.xpose.msra.mxu0 0.0
    %230 = vmatprep.subr.mxu0 0.0
    %231 = vmatpush1.xpose.msra.mxu0 0.0
    %232 = vmatprep.subr.mxu0 0.0
    %233 = vmatpush1.xpose.msra.mxu0 0.0
    %234 = vmatprep.subr.mxu0 0.0
    %235 = vmatpush1.xpose.msra.mxu0 0.0
    %236 = vmatprep.mubr.f32.mxu0 0.0
    %237 = vmatmul.mubr.f32.gmra.mrb[0].mxu0 %v168
    %v238 = vpop.f32.mrb[0].mxu0
    %v239 = vadd.f32 0.0, %v238
    %v240 = vpop.f32.mrb[0].mxu0
    %241 = vdwg.mxu0
    %vm242 = vcmask 64512
    %v243 = vsel %vm242, %v239, -inf
    %244 = vmax.xlane.f32.xlu0 %v243
    %v245 = vpop.xlane.xlu0 %244
    %v246 = vsub.f32 %v239, %v245
    %v247 = vmul.f32 %v246, 1.442695
    %v248 = vpow.pop %v247
    %v249 = vsel %vm242, %v248, 0.0
    %250 = vadd.xlane.f32.xlu0 %v249
    %v251 = vpop.xlane.xlu0 %250
    %v252 = vrcp.pop %v251
    %v253 = vmul.f32 %v248, %v252
    %254 = vrot.lane.b32.xlu0 %v149, 64
    %v255 = vpop.permute.xlu0 %254
    %v258 = vsel %vm242, %v253, 0
    %260 = vmatprep.subr.mxu0 0.0
    %261 = vmatpush1.msra.mxu0 %v255
    %262 = vmatprep.subr.mxu0 0.0
    %263 = vmatpush1.msra.mxu0 0.0
    %264 = vmatprep.subr.mxu0 0.0
    %265 = vmatpush1.msra.mxu0 0.0
    %266 = vmatprep.subr.mxu0 0.0
    %267 = vmatpush1.msra.mxu0 0.0
    %268 = vmatprep.subr.mxu0 0.0
    %269 = vmatpush1.msra.mxu0 0.0
    %270 = vmatprep.subr.mxu0 0.0
    %271 = vmatpush1.msra.mxu0 0.0
    %272 = vmatprep.subr.mxu0 0.0
    %273 = vmatpush1.msra.mxu0 0.0
    %274 = vmatprep.subr.mxu0 0.0
    %275 = vmatpush1.msra.mxu0 0.0
    %276 = vmatprep.subr.mxu0 0.0
    %277 = vmatpush1.msra.mxu0 0.0
    %278 = vmatprep.subr.mxu0 0.0
    %279 = vmatpush1.msra.mxu0 0.0
    %280 = vmatprep.subr.mxu0 0.0
    %281 = vmatpush1.msra.mxu0 0.0
    %282 = vmatprep.subr.mxu0 0.0
    %283 = vmatpush1.msra.mxu0 0.0
    %284 = vmatprep.subr.mxu0 0.0
    %285 = vmatpush1.msra.mxu0 0.0
    %286 = vmatprep.subr.mxu0 0.0
    %287 = vmatpush1.msra.mxu0 0.0
    %288 = vmatprep.subr.mxu0 0.0
    %289 = vmatpush1.msra.mxu0 0.0
    %290 = vmatprep.subr.mxu0 0.0
    %291 = vmatpush1.msra.mxu0 0.0
    %292 = vmatprep.subr.mxu0 0.0
    %293 = vmatpush1.msra.mxu0 0.0
    %294 = vmatprep.subr.mxu0 0.0
    %295 = vmatpush1.msra.mxu0 0.0
    %296 = vmatprep.subr.mxu0 0.0
    %297 = vmatpush1.msra.mxu0 0.0
    %298 = vmatprep.subr.mxu0 0.0
    %299 = vmatpush1.msra.mxu0 0.0
    %300 = vmatprep.subr.mxu0 0.0
    %301 = vmatpush1.msra.mxu0 0.0
    %302 = vmatprep.subr.mxu0 0.0
    %303 = vmatpush1.msra.mxu0 0.0
    %304 = vmatprep.subr.mxu0 0.0
    %305 = vmatpush1.msra.mxu0 0.0
    %306 = vmatprep.subr.mxu0 0.0
    %307 = vmatpush1.msra.mxu0 0.0
    %308 = vmatprep.subr.mxu0 0.0
    %309 = vmatpush1.msra.mxu0 0.0
    %310 = vmatprep.subr.mxu0 0.0
    %311 = vmatpush1.msra.mxu0 0.0
    %312 = vmatprep.subr.mxu0 0.0
    %313 = vmatpush1.msra.mxu0 0.0
    %314 = vmatprep.subr.mxu0 0.0
    %315 = vmatpush1.msra.mxu0 0.0
    %316 = vmatprep.subr.mxu0 0.0
    %317 = vmatpush1.msra.mxu0 0.0
    %318 = vmatprep.subr.mxu0 0.0
    %319 = vmatpush1.msra.mxu0 0.0
    %320 = vmatprep.subr.mxu0 0.0
    %321 = vmatpush1.msra.mxu0 0.0
    %322 = vmatprep.subr.mxu0 0.0
    %323 = vmatpush1.msra.mxu0 0.0
    %324 = vmatprep.mubr.f32.mxu0 0.0
    %325 = vmatmul.mubr.f32.gmra.mrb[0].mxu0 %v258
    %v326 = vpop.f32.mrb[0].mxu0
    %v327 = vadd.f32 0.0, %v326
    %v328 = vpop.f32.mrb[0].mxu0
    %329 = vdwg.mxu0
    %v330 = vld [vmem:[#allocation7] sm:$0xff]
    %v331 = vld [vmem:[#allocation7 + $0x8] sm:$0xff]
    %v333 = vsel %vm167, %v327, 0
    %335 = vmatprep.subr.mxu0 0.0
    %336 = vmatpush1.msra.mxu0 %v330
    %337 = vmatprep.subr.mxu0 0.0
    %338 = vmatpush1.msra.mxu0 %v331
    %339 = vmatprep.subr.mxu0 0.0
    %340 = vmatpush1.msra.mxu0 0.0
    %341 = vmatprep.subr.mxu0 0.0
    %342 = vmatpush1.msra.mxu0 0.0
    %343 = vmatprep.subr.mxu0 0.0
    %344 = vmatpush1.msra.mxu0 0.0
    %345 = vmatprep.subr.mxu0 0.0
    %346 = vmatpush1.msra.mxu0 0.0
    %347 = vmatprep.subr.mxu0 0.0
    %348 = vmatpush1.msra.mxu0 0.0
    %349 = vmatprep.subr.mxu0 0.0
    %350 = vmatpush1.msra.mxu0 0.0
    %351 = vmatprep.subr.mxu0 0.0
    %352 = vmatpush1.msra.mxu0 0.0
    %353 = vmatprep.subr.mxu0 0.0
    %354 = vmatpush1.msra.mxu0 0.0
    %355 = vmatprep.subr.mxu0 0.0
    %356 = vmatpush1.msra.mxu0 0.0
    %357 = vmatprep.subr.mxu0 0.0
    %358 = vmatpush1.msra.mxu0 0.0
    %359 = vmatprep.subr.mxu0 0.0
    %360 = vmatpush1.msra.mxu0 0.0
    %361 = vmatprep.subr.mxu0 0.0
    %362 = vmatpush1.msra.mxu0 0.0
    %363 = vmatprep.subr.mxu0 0.0
    %364 = vmatpush1.msra.mxu0 0.0
    %365 = vmatprep.subr.mxu0 0.0
    %366 = vmatpush1.msra.mxu0 0.0
    %367 = vmatprep.subr.mxu0 0.0
    %368 = vmatpush1.msra.mxu0 0.0
    %369 = vmatprep.subr.mxu0 0.0
    %370 = vmatpush1.msra.mxu0 0.0
    %371 = vmatprep.subr.mxu0 0.0
    %372 = vmatpush1.msra.mxu0 0.0
    %373 = vmatprep.subr.mxu0 0.0
    %374 = vmatpush1.msra.mxu0 0.0
    %375 = vmatprep.subr.mxu0 0.0
    %376 = vmatpush1.msra.mxu0 0.0
    %377 = vmatprep.subr.mxu0 0.0
    %378 = vmatpush1.msra.mxu0 0.0
    %379 = vmatprep.subr.mxu0 0.0
    %380 = vmatpush1.msra.mxu0 0.0
    %381 = vmatprep.subr.mxu0 0.0
    %382 = vmatpush1.msra.mxu0 0.0
    %383 = vmatprep.subr.mxu0 0.0
    %384 = vmatpush1.msra.mxu0 0.0
    %385 = vmatprep.subr.mxu0 0.0
    %386 = vmatpush1.msra.mxu0 0.0
    %387 = vmatprep.subr.mxu0 0.0
    %388 = vmatpush1.msra.mxu0 0.0
    %389 = vmatprep.subr.mxu0 0.0
    %390 = vmatpush1.msra.mxu0 0.0
    %391 = vmatprep.subr.mxu0 0.0
    %392 = vmatpush1.msra.mxu0 0.0
    %393 = vmatprep.subr.mxu0 0.0
    %394 = vmatpush1.msra.mxu0 0.0
    %395 = vmatprep.subr.mxu0 0.0
    %396 = vmatpush1.msra.mxu0 0.0
    %397 = vmatprep.subr.mxu0 0.0
    %398 = vmatpush1.msra.mxu0 0.0
    %399 = vmatprep.mubr.f32.mxu0 0.0
    %400 = vmatmul.mubr.f32.gmra.mrb[0].mxu0 %v333
    %v401 = vpop.f32.mrb[0].mxu0
    %v402 = vadd.f32 0.0, %v401
    %v403 = vpop.f32.mrb[0].mxu0
    %404 = vdwg.mxu0
    %v405 = vadd.f32 %v162, %v402
    %406 = vrot.lane.b32.xlu0 %v149, 112
    %v407 = vpop.permute.xlu0 %406
    %408 = vrot.lane.b32.xlu0 %v149, 80
    %v409 = vpop.permute.xlu0 %408
    %v410 = vsel %vm167, %v407, 0
    %v412 = vsel %vm167, %v409, 0
    %414 = vmatprep.subr.mxu0 0.0
    %415 = vmatpush1.xpose.msra.mxu0 %v412
    %416 = vmatprep.subr.mxu0 0.0
    %417 = vmatpush1.xpose.msra.mxu0 0.0
    %418 = vmatprep.subr.mxu0 0.0
    %419 = vmatpush1.xpose.msra.mxu0 0.0
    %420 = vmatprep.subr.mxu0 0.0
    %421 = vmatpush1.xpose.msra.mxu0 0.0
    %422 = vmatprep.subr.mxu0 0.0
    %423 = vmatpush1.xpose.msra.mxu0 0.0
    %424 = vmatprep.subr.mxu0 0.0
    %425 = vmatpush1.xpose.msra.mxu0 0.0
    %426 = vmatprep.subr.mxu0 0.0
    %427 = vmatpush1.xpose.msra.mxu0 0.0
    %428 = vmatprep.subr.mxu0 0.0
    %429 = vmatpush1.xpose.msra.mxu0 0.0
    %430 = vmatprep.subr.mxu0 0.0
    %431 = vmatpush1.xpose.msra.mxu0 0.0
    %432 = vmatprep.subr.mxu0 0.0
    %433 = vmatpush1.xpose.msra.mxu0 0.0
    %434 = vmatprep.subr.mxu0 0.0
    %435 = vmatpush1.xpose.msra.mxu0 0.0
    %436 = vmatprep.subr.mxu0 0.0
    %437 = vmatpush1.xpose.msra.mxu0 0.0
    %438 = vmatprep.subr.mxu0 0.0
    %439 = vmatpush1.xpose.msra.mxu0 0.0
    %440 = vmatprep.subr.mxu0 0.0
    %441 = vmatpush1.xpose.msra.mxu0 0.0
    %442 = vmatprep.subr.mxu0 0.0
    %443 = vmatpush1.xpose.msra.mxu0 0.0
    %444 = vmatprep.subr.mxu0 0.0
    %445 = vmatpush1.xpose.msra.mxu0 0.0
    %446 = vmatprep.subr.mxu0 0.0
    %447 = vmatpush1.xpose.msra.mxu0 0.0
    %448 = vmatprep.subr.mxu0 0.0
    %449 = vmatpush1.xpose.msra.mxu0 0.0
    %450 = vmatprep.subr.mxu0 0.0
    %451 = vmatpush1.xpose.msra.mxu0 0.0
    %452 = vmatprep.subr.mxu0 0.0
    %453 = vmatpush1.xpose.msra.mxu0 0.0
    %454 = vmatprep.subr.mxu0 0.0
    %455 = vmatpush1.xpose.msra.mxu0 0.0
    %456 = vmatprep.subr.mxu0 0.0
    %457 = vmatpush1.xpose.msra.mxu0 0.0
    %458 = vmatprep.subr.mxu0 0.0
    %459 = vmatpush1.xpose.msra.mxu0 0.0
    %460 = vmatprep.subr.mxu0 0.0
    %461 = vmatpush1.xpose.msra.mxu0 0.0
    %462 = vmatprep.subr.mxu0 0.0
    %463 = vmatpush1.xpose.msra.mxu0 0.0
    %464 = vmatprep.subr.mxu0 0.0
    %465 = vmatpush1.xpose.msra.mxu0 0.0
    %466 = vmatprep.subr.mxu0 0.0
    %467 = vmatpush1.xpose.msra.mxu0 0.0
    %468 = vmatprep.subr.mxu0 0.0
    %469 = vmatpush1.xpose.msra.mxu0 0.0
    %470 = vmatprep.subr.mxu0 0.0
    %471 = vmatpush1.xpose.msra.mxu0 0.0
    %472 = vmatprep.subr.mxu0 0.0
    %473 = vmatpush1.xpose.msra.mxu0 0.0
    %474 = vmatprep.subr.mxu0 0.0
    %475 = vmatpush1.xpose.msra.mxu0 0.0
    %476 = vmatprep.subr.mxu0 0.0
    %477 = vmatpush1.xpose.msra.mxu0 0.0
    %478 = vmatprep.mubr.f32.mxu0 0.0
    %479 = vmatmul.mubr.f32.gmra.mrb[0].mxu0 %v410
    %v480 = vpop.f32.mrb[0].mxu0
    %v481 = vadd.f32 0.0, %v480
    %v482 = vpop.f32.mrb[0].mxu0
    %483 = vdwg.mxu0
    %v484 = vsel %vm242, %v481, -inf
    %485 = vmax.xlane.f32.xlu0 %v484
    %v486 = vpop.xlane.xlu0 %485
    %v487 = vsub.f32 %v481, %v486
    %v488 = vmul.f32 %v487, 1.442695
    %v489 = vpow.pop %v488
    %v490 = vsel %vm242, %v489, 0.0
    %491 = vadd.xlane.f32.xlu0 %v490
    %v492 = vpop.xlane.xlu0 %491
    %v493 = vrcp.pop %v492
    %v494 = vmul.f32 %v489, %v493
    %495 = vrot.lane.b32.xlu0 %v149, 48
    %v496 = vpop.permute.xlu0 %495
    %v499 = vsel %vm242, %v494, 0
    %501 = vmatprep.subr.mxu0 0.0
    %502 = vmatpush1.msra.mxu0 %v496
    %503 = vmatprep.subr.mxu0 0.0
    %504 = vmatpush1.msra.mxu0 0.0
    %505 = vmatprep.subr.mxu0 0.0
    %506 = vmatpush1.msra.mxu0 0.0
    %507 = vmatprep.subr.mxu0 0.0
    %508 = vmatpush1.msra.mxu0 0.0
    %509 = vmatprep.subr.mxu0 0.0
    %510 = vmatpush1.msra.mxu0 0.0
    %511 = vmatprep.subr.mxu0 0.0
    %512 = vmatpush1.msra.mxu0 0.0
    %513 = vmatprep.subr.mxu0 0.0
    %514 = vmatpush1.msra.mxu0 0.0
    %515 = vmatprep.subr.mxu0 0.0
    %516 = vmatpush1.msra.mxu0 0.0
    %517 = vmatprep.subr.mxu0 0.0
    %518 = vmatpush1.msra.mxu0 0.0
    %519 = vmatprep.subr.mxu0 0.0
    %520 = vmatpush1.msra.mxu0 0.0
    %521 = vmatprep.subr.mxu0 0.0
    %522 = vmatpush1.msra.mxu0 0.0
    %523 = vmatprep.subr.mxu0 0.0
    %524 = vmatpush1.msra.mxu0 0.0
    %525 = vmatprep.subr.mxu0 0.0
    %526 = vmatpush1.msra.mxu0 0.0
    %527 = vmatprep.subr.mxu0 0.0
    %528 = vmatpush1.msra.mxu0 0.0
    %529 = vmatprep.subr.mxu0 0.0
    %530 = vmatpush1.msra.mxu0 0.0
    %531 = vmatprep.subr.mxu0 0.0
    %532 = vmatpush1.msra.mxu0 0.0
    %533 = vmatprep.subr.mxu0 0.0
    %534 = vmatpush1.msra.mxu0 0.0
    %535 = vmatprep.subr.mxu0 0.0
    %536 = vmatpush1.msra.mxu0 0.0
    %537 = vmatprep.subr.mxu0 0.0
    %538 = vmatpush1.msra.mxu0 0.0
    %539 = vmatprep.subr.mxu0 0.0
    %540 = vmatpush1.msra.mxu0 0.0
    %541 = vmatprep.subr.mxu0 0.0
    %542 = vmatpush1.msra.mxu0 0.0
    %543 = vmatprep.subr.mxu0 0.0
    %544 = vmatpush1.msra.mxu0 0.0
    %545 = vmatprep.subr.mxu0 0.0
    %546 = vmatpush1.msra.mxu0 0.0
    %547 = vmatprep.subr.mxu0 0.0
    %548 = vmatpush1.msra.mxu0 0.0
    %549 = vmatprep.subr.mxu0 0.0
    %550 = vmatpush1.msra.mxu0 0.0
    %551 = vmatprep.subr.mxu0 0.0
    %552 = vmatpush1.msra.mxu0 0.0
    %553 = vmatprep.subr.mxu0 0.0
    %554 = vmatpush1.msra.mxu0 0.0
    %555 = vmatprep.subr.mxu0 0.0
    %556 = vmatpush1.msra.mxu0 0.0
    %557 = vmatprep.subr.mxu0 0.0
    %558 = vmatpush1.msra.mxu0 0.0
    %559 = vmatprep.subr.mxu0 0.0
    %560 = vmatpush1.msra.mxu0 0.0
    %561 = vmatprep.subr.mxu0 0.0
    %562 = vmatpush1.msra.mxu0 0.0
    %563 = vmatprep.subr.mxu0 0.0
    %564 = vmatpush1.msra.mxu0 0.0
    %565 = vmatprep.mubr.f32.mxu0 0.0
    %566 = vmatmul.mubr.f32.gmra.mrb[0].mxu0 %v499
    %v567 = vpop.f32.mrb[0].mxu0
    %v568 = vadd.f32 0.0, %v567
    %v569 = vpop.f32.mrb[0].mxu0
    %570 = vdwg.mxu0
    %v571 = vld [vmem:[#allocation7 + $0x10] sm:$0xff]
    %v572 = vld [vmem:[#allocation7 + $0x18] sm:$0xff]
    %v574 = vsel %vm167, %v568, 0
    %576 = vmatprep.subr.mxu0 0.0
    %577 = vmatpush1.msra.mxu0 %v571
    %578 = vmatprep.subr.mxu0 0.0
    %579 = vmatpush1.msra.mxu0 %v572
    %580 = vmatprep.subr.mxu0 0.0
    %581 = vmatpush1.msra.mxu0 0.0
    %582 = vmatprep.subr.mxu0 0.0
    %583 = vmatpush1.msra.mxu0 0.0
    %584 = vmatprep.subr.mxu0 0.0
    %585 = vmatpush1.msra.mxu0 0.0
    %586 = vmatprep.subr.mxu0 0.0
    %587 = vmatpush1.msra.mxu0 0.0
    %588 = vmatprep.subr.mxu0 0.0
    %589 = vmatpush1.msra.mxu0 0.0
    %590 = vmatprep.subr.mxu0 0.0
    %591 = vmatpush1.msra.mxu0 0.0
    %592 = vmatprep.subr.mxu0 0.0
    %593 = vmatpush1.msra.mxu0 0.0
    %594 = vmatprep.subr.mxu0 0.0
    %595 = vmatpush1.msra.mxu0 0.0
    %596 = vmatprep.subr.mxu0 0.0
    %597 = vmatpush1.msra.mxu0 0.0
    %598 = vmatprep.subr.mxu0 0.0
    %599 = vmatpush1.msra.mxu0 0.0
    %600 = vmatprep.subr.mxu0 0.0
    %601 = vmatpush1.msra.mxu0 0.0
    %602 = vmatprep.subr.mxu0 0.0
    %603 = vmatpush1.msra.mxu0 0.0
    %604 = vmatprep.subr.mxu0 0.0
    %605 = vmatpush1.msra.mxu0 0.0
    %606 = vmatprep.subr.mxu0 0.0
    %607 = vmatpush1.msra.mxu0 0.0
    %608 = vmatprep.subr.mxu0 0.0
    %609 = vmatpush1.msra.mxu0 0.0
    %610 = vmatprep.subr.mxu0 0.0
    %611 = vmatpush1.msra.mxu0 0.0
    %612 = vmatprep.subr.mxu0 0.0
    %613 = vmatpush1.msra.mxu0 0.0
    %614 = vmatprep.subr.mxu0 0.0
    %615 = vmatpush1.msra.mxu0 0.0
    %616 = vmatprep.subr.mxu0 0.0
    %617 = vmatpush1.msra.mxu0 0.0
    %618 = vmatprep.subr.mxu0 0.0
    %619 = vmatpush1.msra.mxu0 0.0
    %620 = vmatprep.subr.mxu0 0.0
    %621 = vmatpush1.msra.mxu0 0.0
    %622 = vmatprep.subr.mxu0 0.0
    %623 = vmatpush1.msra.mxu0 0.0
    %624 = vmatprep.subr.mxu0 0.0
    %625 = vmatpush1.msra.mxu0 0.0
    %626 = vmatprep.subr.mxu0 0.0
    %627 = vmatpush1.msra.mxu0 0.0
    %628 = vmatprep.subr.mxu0 0.0
    %629 = vmatpush1.msra.mxu0 0.0
    %630 = vmatprep.subr.mxu0 0.0
    %631 = vmatpush1.msra.mxu0 0.0
    %632 = vmatprep.subr.mxu0 0.0
    %633 = vmatpush1.msra.mxu0 0.0
    %634 = vmatprep.subr.mxu0 0.0
    %635 = vmatpush1.msra.mxu0 0.0
    %636 = vmatprep.subr.mxu0 0.0
    %637 = vmatpush1.msra.mxu0 0.0
    %638 = vmatprep.subr.mxu0 0.0
    %639 = vmatpush1.msra.mxu0 0.0
    %640 = vmatprep.mubr.f32.mxu0 0.0
    %641 = vmatmul.mubr.f32.gmra.mrb[0].mxu0 %v574
    %v642 = vpop.f32.mrb[0].mxu0
    %v643 = vadd.f32 0.0, %v642
    %v644 = vpop.f32.mrb[0].mxu0
    %645 = vdwg.mxu0
    %v646 = vadd.f32 %v405, %v643
    %647 = vst.msk [vmem:[#allocation8] sm:$0xff] %vm75, %v646
    %v648 = vld [vmem:[%s4] sm:$0x1]
    %v650 = vlaneseq
    %v651 = vshrl.u32 %v650, 7
    %v652 = vsub.s32 0, %v651
    %v653 = vrot.slane %v648, %v652
    %656 = vrot.lane.b32.xlu0 %v154, 96
    %v657 = vpop.permute.xlu0 %656
    %v658 = vsel %vm167, %v154, 0
    %v660 = vsel %vm167, %v657, 0
    %662 = vmatprep.subr.mxu0 0.0
    %663 = vmatpush1.xpose.msra.mxu0 %v660
    %664 = vmatprep.subr.mxu0 0.0
    %665 = vmatpush1.xpose.msra.mxu0 0.0
    %666 = vmatprep.subr.mxu0 0.0
    %667 = vmatpush1.xpose.msra.mxu0 0.0
    %668 = vmatprep.subr.mxu0 0.0
    %669 = vmatpush1.xpose.msra.mxu0 0.0
    %670 = vmatprep.subr.mxu0 0.0
    %671 = vmatpush1.xpose.msra.mxu0 0.0
    %672 = vmatprep.subr.mxu0 0.0
    %673 = vmatpush1.xpose.msra.mxu0 0.0
    %674 = vmatprep.subr.mxu0 0.0
    %675 = vmatpush1.xpose.msra.mxu0 0.0
    %676 = vmatprep.subr.mxu0 0.0
    %677 = vmatpush1.xpose.msra.mxu0 0.0
    %678 = vmatprep.subr.mxu0 0.0
    %679 = vmatpush1.xpose.msra.mxu0 0.0
    %680 = vmatprep.subr.mxu0 0.0
    %681 = vmatpush1.xpose.msra.mxu0 0.0
    %682 = vmatprep.subr.mxu0 0.0
    %683 = vmatpush1.xpose.msra.mxu0 0.0
    %684 = vmatprep.subr.mxu0 0.0
    %685 = vmatpush1.xpose.msra.mxu0 0.0
    %686 = vmatprep.subr.mxu0 0.0
    %687 = vmatpush1.xpose.msra.mxu0 0.0
    %688 = vmatprep.subr.mxu0 0.0
    %689 = vmatpush1.xpose.msra.mxu0 0.0
    %690 = vmatprep.subr.mxu0 0.0
    %691 = vmatpush1.xpose.msra.mxu0 0.0
    %692 = vmatprep.subr.mxu0 0.0
    %693 = vmatpush1.xpose.msra.mxu0 0.0
    %694 = vmatprep.subr.mxu0 0.0
    %695 = vmatpush1.xpose.msra.mxu0 0.0
    %696 = vmatprep.subr.mxu0 0.0
    %697 = vmatpush1.xpose.msra.mxu0 0.0
    %698 = vmatprep.subr.mxu0 0.0
    %699 = vmatpush1.xpose.msra.mxu0 0.0
    %700 = vmatprep.subr.mxu0 0.0
    %701 = vmatpush1.xpose.msra.mxu0 0.0
    %702 = vmatprep.subr.mxu0 0.0
    %703 = vmatpush1.xpose.msra.mxu0 0.0
    %704 = vmatprep.subr.mxu0 0.0
    %705 = vmatpush1.xpose.msra.mxu0 0.0
    %706 = vmatprep.subr.mxu0 0.0
    %707 = vmatpush1.xpose.msra.mxu0 0.0
    %708 = vmatprep.subr.mxu0 0.0
    %709 = vmatpush1.xpose.msra.mxu0 0.0
    %710 = vmatprep.subr.mxu0 0.0
    %711 = vmatpush1.xpose.msra.mxu0 0.0
    %712 = vmatprep.subr.mxu0 0.0
    %713 = vmatpush1.xpose.msra.mxu0 0.0
    %714 = vmatprep.subr.mxu0 0.0
    %715 = vmatpush1.xpose.msra.mxu0 0.0
    %716 = vmatprep.subr.mxu0 0.0
    %717 = vmatpush1.xpose.msra.mxu0 0.0
    %718 = vmatprep.subr.mxu0 0.0
    %719 = vmatpush1.xpose.msra.mxu0 0.0
    %720 = vmatprep.subr.mxu0 0.0
    %721 = vmatpush1.xpose.msra.mxu0 0.0
    %722 = vmatprep.subr.mxu0 0.0
    %723 = vmatpush1.xpose.msra.mxu0 0.0
    %724 = vmatprep.subr.mxu0 0.0
    %725 = vmatpush1.xpose.msra.mxu0 0.0
    %726 = vmatprep.mubr.f32.mxu0 0.0
    %727 = vmatmul.mubr.f32.gmra.mrb[0].mxu0 %v658
    %v728 = vpop.f32.mrb[0].mxu0
    %v729 = vadd.f32 0.0, %v728
    %v730 = vpop.f32.mrb[0].mxu0
    %731 = vdwg.mxu0
    %v732 = vsel %vm242, %v729, -inf
    %733 = vmax.xlane.f32.xlu0 %v732
    %v734 = vpop.xlane.xlu0 %733
    %v735 = vsub.f32 %v729, %v734
    %v736 = vmul.f32 %v735, 1.442695
    %v737 = vpow.pop %v736
    %v738 = vsel %vm242, %v737, 0.0
    %739 = vadd.xlane.f32.xlu0 %v738
    %v740 = vpop.xlane.xlu0 %739
    %v741 = vrcp.pop %v740
    %v742 = vmul.f32 %v737, %v741
    %743 = vrot.lane.b32.xlu0 %v154, 64
    %v744 = vpop.permute.xlu0 %743
    %v747 = vsel %vm242, %v742, 0
    %749 = vmatprep.subr.mxu0 0.0
    %750 = vmatpush1.msra.mxu0 %v744
    %751 = vmatprep.subr.mxu0 0.0
    %752 = vmatpush1.msra.mxu0 0.0
    %753 = vmatprep.subr.mxu0 0.0
    %754 = vmatpush1.msra.mxu0 0.0
    %755 = vmatprep.subr.mxu0 0.0
    %756 = vmatpush1.msra.mxu0 0.0
    %757 = vmatprep.subr.mxu0 0.0
    %758 = vmatpush1.msra.mxu0 0.0
    %759 = vmatprep.subr.mxu0 0.0
    %760 = vmatpush1.msra.mxu0 0.0
    %761 = vmatprep.subr.mxu0 0.0
    %762 = vmatpush1.msra.mxu0 0.0
    %763 = vmatprep.subr.mxu0 0.0
    %764 = vmatpush1.msra.mxu0 0.0
    %765 = vmatprep.subr.mxu0 0.0
    %766 = vmatpush1.msra.mxu0 0.0
    %767 = vmatprep.subr.mxu0 0.0
    %768 = vmatpush1.msra.mxu0 0.0
    %769 = vmatprep.subr.mxu0 0.0
    %770 = vmatpush1.msra.mxu0 0.0
    %771 = vmatprep.subr.mxu0 0.0
    %772 = vmatpush1.msra.mxu0 0.0
    %773 = vmatprep.subr.mxu0 0.0
    %774 = vmatpush1.msra.mxu0 0.0
    %775 = vmatprep.subr.mxu0 0.0
    %776 = vmatpush1.msra.mxu0 0.0
    %777 = vmatprep.subr.mxu0 0.0
    %778 = vmatpush1.msra.mxu0 0.0
    %779 = vmatprep.subr.mxu0 0.0
    %780 = vmatpush1.msra.mxu0 0.0
    %781 = vmatprep.subr.mxu0 0.0
    %782 = vmatpush1.msra.mxu0 0.0
    %783 = vmatprep.subr.mxu0 0.0
    %784 = vmatpush1.msra.mxu0 0.0
    %785 = vmatprep.subr.mxu0 0.0
    %786 = vmatpush1.msra.mxu0 0.0
    %787 = vmatprep.subr.mxu0 0.0
    %788 = vmatpush1.msra.mxu0 0.0
    %789 = vmatprep.subr.mxu0 0.0
    %790 = vmatpush1.msra.mxu0 0.0
    %791 = vmatprep.subr.mxu0 0.0
    %792 = vmatpush1.msra.mxu0 0.0
    %793 = vmatprep.subr.mxu0 0.0
    %794 = vmatpush1.msra.mxu0 0.0
    %795 = vmatprep.subr.mxu0 0.0
    %796 = vmatpush1.msra.mxu0 0.0
    %797 = vmatprep.subr.mxu0 0.0
    %798 = vmatpush1.msra.mxu0 0.0
    %799 = vmatprep.subr.mxu0 0.0
    %800 = vmatpush1.msra.mxu0 0.0
    %801 = vmatprep.subr.mxu0 0.0
    %802 = vmatpush1.msra.mxu0 0.0
    %803 = vmatprep.subr.mxu0 0.0
    %804 = vmatpush1.msra.mxu0 0.0
    %805 = vmatprep.subr.mxu0 0.0
    %806 = vmatpush1.msra.mxu0 0.0
    %807 = vmatprep.subr.mxu0 0.0
    %808 = vmatpush1.msra.mxu0 0.0
    %809 = vmatprep.subr.mxu0 0.0
    %810 = vmatpush1.msra.mxu0 0.0
    %811 = vmatprep.subr.mxu0 0.0
    %812 = vmatpush1.msra.mxu0 0.0
    %813 = vmatprep.mubr.f32.mxu0 0.0
    %814 = vmatmul.mubr.f32.gmra.mrb[0].mxu0 %v747
    %v815 = vpop.f32.mrb[0].mxu0
    %v816 = vadd.f32 0.0, %v815
    %v817 = vpop.f32.mrb[0].mxu0
    %818 = vdwg.mxu0
    %v819 = vld [vmem:[#allocation7] sm:$0xff]
    %v820 = vld [vmem:[#allocation7 + $0x8] sm:$0xff]
    %v822 = vsel %vm167, %v816, 0
    %824 = vmatprep.subr.mxu0 0.0
    %825 = vmatpush1.msra.mxu0 %v819
    %826 = vmatprep.subr.mxu0 0.0
    %827 = vmatpush1.msra.mxu0 %v820
    %828 = vmatprep.subr.mxu0 0.0
    %829 = vmatpush1.msra.mxu0 0.0
    %830 = vmatprep.subr.mxu0 0.0
    %831 = vmatpush1.msra.mxu0 0.0
    %832 = vmatprep.subr.mxu0 0.0
    %833 = vmatpush1.msra.mxu0 0.0
    %834 = vmatprep.subr.mxu0 0.0
    %835 = vmatpush1.msra.mxu0 0.0
    %836 = vmatprep.subr.mxu0 0.0
    %837 = vmatpush1.msra.mxu0 0.0
    %838 = vmatprep.subr.mxu0 0.0
    %839 = vmatpush1.msra.mxu0 0.0
    %840 = vmatprep.subr.mxu0 0.0
    %841 = vmatpush1.msra.mxu0 0.0
    %842 = vmatprep.subr.mxu0 0.0
    %843 = vmatpush1.msra.mxu0 0.0
    %844 = vmatprep.subr.mxu0 0.0
    %845 = vmatpush1.msra.mxu0 0.0
    %846 = vmatprep.subr.mxu0 0.0
    %847 = vmatpush1.msra.mxu0 0.0
    %848 = vmatprep.subr.mxu0 0.0
    %849 = vmatpush1.msra.mxu0 0.0
    %850 = vmatprep.subr.mxu0 0.0
    %851 = vmatpush1.msra.mxu0 0.0
    %852 = vmatprep.subr.mxu0 0.0
    %853 = vmatpush1.msra.mxu0 0.0
    %854 = vmatprep.subr.mxu0 0.0
    %855 = vmatpush1.msra.mxu0 0.0
    %856 = vmatprep.subr.mxu0 0.0
    %857 = vmatpush1.msra.mxu0 0.0
    %858 = vmatprep.subr.mxu0 0.0
    %859 = vmatpush1.msra.mxu0 0.0
    %860 = vmatprep.subr.mxu0 0.0
    %861 = vmatpush1.msra.mxu0 0.0
    %862 = vmatprep.subr.mxu0 0.0
    %863 = vmatpush1.msra.mxu0 0.0
    %864 = vmatprep.subr.mxu0 0.0
    %865 = vmatpush1.msra.mxu0 0.0
    %866 = vmatprep.subr.mxu0 0.0
    %867 = vmatpush1.msra.mxu0 0.0
    %868 = vmatprep.subr.mxu0 0.0
    %869 = vmatpush1.msra.mxu0 0.0
    %870 = vmatprep.subr.mxu0 0.0
    %871 = vmatpush1.msra.mxu0 0.0
    %872 = vmatprep.subr.mxu0 0.0
    %873 = vmatpush1.msra.mxu0 0.0
    %874 = vmatprep.subr.mxu0 0.0
    %875 = vmatpush1.msra.mxu0 0.0
    %876 = vmatprep.subr.mxu0 0.0
    %877 = vmatpush1.msra.mxu0 0.0
    %878 = vmatprep.subr.mxu0 0.0
    %879 = vmatpush1.msra.mxu0 0.0
    %880 = vmatprep.subr.mxu0 0.0
    %881 = vmatpush1.msra.mxu0 0.0
    %882 = vmatprep.subr.mxu0 0.0
    %883 = vmatpush1.msra.mxu0 0.0
    %884 = vmatprep.subr.mxu0 0.0
    %885 = vmatpush1.msra.mxu0 0.0
    %886 = vmatprep.subr.mxu0 0.0
    %887 = vmatpush1.msra.mxu0 0.0
    %888 = vmatprep.mubr.f32.mxu0 0.0
    %889 = vmatmul.mubr.f32.gmra.mrb[0].mxu0 %v822
    %v890 = vpop.f32.mrb[0].mxu0
    %v891 = vadd.f32 0.0, %v890
    %v892 = vpop.f32.mrb[0].mxu0
    %893 = vdwg.mxu0
    %v894 = vadd.f32 %v653, %v891
    %895 = vrot.lane.b32.xlu0 %v154, 112
    %v896 = vpop.permute.xlu0 %895
    %897 = vrot.lane.b32.xlu0 %v154, 80
    %v898 = vpop.permute.xlu0 %897
    %v899 = vsel %vm167, %v896, 0
    %v901 = vsel %vm167, %v898, 0
    %903 = vmatprep.subr.mxu0 0.0
    %904 = vmatpush1.xpose.msra.mxu0 %v901
    %905 = vmatprep.subr.mxu0 0.0
    %906 = vmatpush1.xpose.msra.mxu0 0.0
    %907 = vmatprep.subr.mxu0 0.0
    %908 = vmatpush1.xpose.msra.mxu0 0.0
    %909 = vmatprep.subr.mxu0 0.0
    %910 = vmatpush1.xpose.msra.mxu0 0.0
    %911 = vmatprep.subr.mxu0 0.0
    %912 = vmatpush1.xpose.msra.mxu0 0.0
    %913 = vmatprep.subr.mxu0 0.0
    %914 = vmatpush1.xpose.msra.mxu0 0.0
    %915 = vmatprep.subr.mxu0 0.0
    %916 = vmatpush1.xpose.msra.mxu0 0.0
    %917 = vmatprep.subr.mxu0 0.0
    %918 = vmatpush1.xpose.msra.mxu0 0.0
    %919 = vmatprep.subr.mxu0 0.0
    %920 = vmatpush1.xpose.msra.mxu0 0.0
    %921 = vmatprep.subr.mxu0 0.0
    %922 = vmatpush1.xpose.msra.mxu0 0.0
    %923 = vmatprep.subr.mxu0 0.0
    %924 = vmatpush1.xpose.msra.mxu0 0.0
    %925 = vmatprep.subr.mxu0 0.0
    %926 = vmatpush1.xpose.msra.mxu0 0.0
    %927 = vmatprep.subr.mxu0 0.0
    %928 = vmatpush1.xpose.msra.mxu0 0.0
    %929 = vmatprep.subr.mxu0 0.0
    %930 = vmatpush1.xpose.msra.mxu0 0.0
    %931 = vmatprep.subr.mxu0 0.0
    %932 = vmatpush1.xpose.msra.mxu0 0.0
    %933 = vmatprep.subr.mxu0 0.0
    %934 = vmatpush1.xpose.msra.mxu0 0.0
    %935 = vmatprep.subr.mxu0 0.0
    %936 = vmatpush1.xpose.msra.mxu0 0.0
    %937 = vmatprep.subr.mxu0 0.0
    %938 = vmatpush1.xpose.msra.mxu0 0.0
    %939 = vmatprep.subr.mxu0 0.0
    %940 = vmatpush1.xpose.msra.mxu0 0.0
    %941 = vmatprep.subr.mxu0 0.0
    %942 = vmatpush1.xpose.msra.mxu0 0.0
    %943 = vmatprep.subr.mxu0 0.0
    %944 = vmatpush1.xpose.msra.mxu0 0.0
    %945 = vmatprep.subr.mxu0 0.0
    %946 = vmatpush1.xpose.msra.mxu0 0.0
    %947 = vmatprep.subr.mxu0 0.0
    %948 = vmatpush1.xpose.msra.mxu0 0.0
    %949 = vmatprep.subr.mxu0 0.0
    %950 = vmatpush1.xpose.msra.mxu0 0.0
    %951 = vmatprep.subr.mxu0 0.0
    %952 = vmatpush1.xpose.msra.mxu0 0.0
    %953 = vmatprep.subr.mxu0 0.0
    %954 = vmatpush1.xpose.msra.mxu0 0.0
    %955 = vmatprep.subr.mxu0 0.0
    %956 = vmatpush1.xpose.msra.mxu0 0.0
    %957 = vmatprep.subr.mxu0 0.0
    %958 = vmatpush1.xpose.msra.mxu0 0.0
    %959 = vmatprep.subr.mxu0 0.0
    %960 = vmatpush1.xpose.msra.mxu0 0.0
    %961 = vmatprep.subr.mxu0 0.0
    %962 = vmatpush1.xpose.msra.mxu0 0.0
    %963 = vmatprep.subr.mxu0 0.0
    %964 = vmatpush1.xpose.msra.mxu0 0.0
    %965 = vmatprep.subr.mxu0 0.0
    %966 = vmatpush1.xpose.msra.mxu0 0.0
    %967 = vmatprep.mubr.f32.mxu0 0.0
    %968 = vmatmul.mubr.f32.gmra.mrb[0].mxu0 %v899
    %v969 = vpop.f32.mrb[0].mxu0
    %v970 = vadd.f32 0.0, %v969
    %v971 = vpop.f32.mrb[0].mxu0
    %972 = vdwg.mxu0
    %v973 = vsel %vm242, %v970, -inf
    %974 = vmax.xlane.f32.xlu0 %v973
    %v975 = vpop.xlane.xlu0 %974
    %v976 = vsub.f32 %v970, %v975
    %v977 = vmul.f32 %v976, 1.442695
    %v978 = vpow.pop %v977
    %v979 = vsel %vm242, %v978, 0.0
    %980 = vadd.xlane.f32.xlu0 %v979
    %v981 = vpop.xlane.xlu0 %980
    %v982 = vrcp.pop %v981
    %v983 = vmul.f32 %v978, %v982
    %984 = vrot.lane.b32.xlu0 %v154, 48
    %v985 = vpop.permute.xlu0 %984
    %v988 = vsel %vm242, %v983, 0
    %990 = vmatprep.subr.mxu0 0.0
    %991 = vmatpush1.msra.mxu0 %v985
    %992 = vmatprep.subr.mxu0 0.0
    %993 = vmatpush1.msra.mxu0 0.0
    %994 = vmatprep.subr.mxu0 0.0
    %995 = vmatpush1.msra.mxu0 0.0
    %996 = vmatprep.subr.mxu0 0.0
    %997 = vmatpush1.msra.mxu0 0.0
    %998 = vmatprep.subr.mxu0 0.0
    %999 = vmatpush1.msra.mxu0 0.0
    %1000 = vmatprep.subr.mxu0 0.0
    %1001 = vmatpush1.msra.mxu0 0.0
    %1002 = vmatprep.subr.mxu0 0.0
    %1003 = vmatpush1.msra.mxu0 0.0
    %1004 = vmatprep.subr.mxu0 0.0
    %1005 = vmatpush1.msra.mxu0 0.0
    %1006 = vmatprep.subr.mxu0 0.0
    %1007 = vmatpush1.msra.mxu0 0.0
    %1008 = vmatprep.subr.mxu0 0.0
    %1009 = vmatpush1.msra.mxu0 0.0
    %1010 = vmatprep.subr.mxu0 0.0
    %1011 = vmatpush1.msra.mxu0 0.0
    %1012 = vmatprep.subr.mxu0 0.0
    %1013 = vmatpush1.msra.mxu0 0.0
    %1014 = vmatprep.subr.mxu0 0.0
    %1015 = vmatpush1.msra.mxu0 0.0
    %1016 = vmatprep.subr.mxu0 0.0
    %1017 = vmatpush1.msra.mxu0 0.0
    %1018 = vmatprep.subr.mxu0 0.0
    %1019 = vmatpush1.msra.mxu0 0.0
    %1020 = vmatprep.subr.mxu0 0.0
    %1021 = vmatpush1.msra.mxu0 0.0
    %1022 = vmatprep.subr.mxu0 0.0
    %1023 = vmatpush1.msra.mxu0 0.0
    %1024 = vmatprep.subr.mxu0 0.0
    %1025 = vmatpush1.msra.mxu0 0.0
    %1026 = vmatprep.subr.mxu0 0.0
    %1027 = vmatpush1.msra.mxu0 0.0
    %1028 = vmatprep.subr.mxu0 0.0
    %1029 = vmatpush1.msra.mxu0 0.0
    %1030 = vmatprep.subr.mxu0 0.0
    %1031 = vmatpush1.msra.mxu0 0.0
    %1032 = vmatprep.subr.mxu0 0.0
    %1033 = vmatpush1.msra.mxu0 0.0
    %1034 = vmatprep.subr.mxu0 0.0
    %1035 = vmatpush1.msra.mxu0 0.0
    %1036 = vmatprep.subr.mxu0 0.0
    %1037 = vmatpush1.msra.mxu0 0.0
    %1038 = vmatprep.subr.mxu0 0.0
    %1039 = vmatpush1.msra.mxu0 0.0
    %1040 = vmatprep.subr.mxu0 0.0
    %1041 = vmatpush1.msra.mxu0 0.0
    %1042 = vmatprep.subr.mxu0 0.0
    %1043 = vmatpush1.msra.mxu0 0.0
    %1044 = vmatprep.subr.mxu0 0.0
    %1045 = vmatpush1.msra.mxu0 0.0
    %1046 = vmatprep.subr.mxu0 0.0
    %1047 = vmatpush1.msra.mxu0 0.0
    %1048 = vmatprep.subr.mxu0 0.0
    %1049 = vmatpush1.msra.mxu0 0.0
    %1050 = vmatprep.subr.mxu0 0.0
    %1051 = vmatpush1.msra.mxu0 0.0
    %1052 = vmatprep.subr.mxu0 0.0
    %1053 = vmatpush1.msra.mxu0 0.0
    %1054 = vmatprep.mubr.f32.mxu0 0.0
    %1055 = vmatmul.mubr.f32.gmra.mrb[0].mxu0 %v988
    %v1056 = vpop.f32.mrb[0].mxu0
    %v1057 = vadd.f32 0.0, %v1056
    %v1058 = vpop.f32.mrb[0].mxu0
    %1059 = vdwg.mxu0
    %v1060 = vld [vmem:[#allocation7 + $0x10] sm:$0xff]
    %v1061 = vld [vmem:[#allocation7 + $0x18] sm:$0xff]
    %v1063 = vsel %vm167, %v1057, 0
    %1065 = vmatprep.subr.mxu0 0.0
    %1066 = vmatpush1.msra.mxu0 %v1060
    %1067 = vmatprep.subr.mxu0 0.0
    %1068 = vmatpush1.msra.mxu0 %v1061
    %1069 = vmatprep.subr.mxu0 0.0
    %1070 = vmatpush1.msra.mxu0 0.0
    %1071 = vmatprep.subr.mxu0 0.0
    %1072 = vmatpush1.msra.mxu0 0.0
    %1073 = vmatprep.subr.mxu0 0.0
    %1074 = vmatpush1.msra.mxu0 0.0
    %1075 = vmatprep.subr.mxu0 0.0
    %1076 = vmatpush1.msra.mxu0 0.0
    %1077 = vmatprep.subr.mxu0 0.0
    %1078 = vmatpush1.msra.mxu0 0.0
    %1079 = vmatprep.subr.mxu0 0.0
    %1080 = vmatpush1.msra.mxu0 0.0
    %1081 = vmatprep.subr.mxu0 0.0
    %1082 = vmatpush1.msra.mxu0 0.0
    %1083 = vmatprep.subr.mxu0 0.0
    %1084 = vmatpush1.msra.mxu0 0.0
    %1085 = vmatprep.subr.mxu0 0.0
    %1086 = vmatpush1.msra.mxu0 0.0
    %1087 = vmatprep.subr.mxu0 0.0
    %1088 = vmatpush1.msra.mxu0 0.0
    %1089 = vmatprep.subr.mxu0 0.0
    %1090 = vmatpush1.msra.mxu0 0.0
    %1091 = vmatprep.subr.mxu0 0.0
    %1092 = vmatpush1.msra.mxu0 0.0
    %1093 = vmatprep.subr.mxu0 0.0
    %1094 = vmatpush1.msra.mxu0 0.0
    %1095 = vmatprep.subr.mxu0 0.0
    %1096 = vmatpush1.msra.mxu0 0.0
    %1097 = vmatprep.subr.mxu0 0.0
    %1098 = vmatpush1.msra.mxu0 0.0
    %1099 = vmatprep.subr.mxu0 0.0
    %1100 = vmatpush1.msra.mxu0 0.0
    %1101 = vmatprep.subr.mxu0 0.0
    %1102 = vmatpush1.msra.mxu0 0.0
    %1103 = vmatprep.subr.mxu0 0.0
    %1104 = vmatpush1.msra.mxu0 0.0
    %1105 = vmatprep.subr.mxu0 0.0
    %1106 = vmatpush1.msra.mxu0 0.0
    %1107 = vmatprep.subr.mxu0 0.0
    %1108 = vmatpush1.msra.mxu0 0.0
    %1109 = vmatprep.subr.mxu0 0.0
    %1110 = vmatpush1.msra.mxu0 0.0
    %1111 = vmatprep.subr.mxu0 0.0
    %1112 = vmatpush1.msra.mxu0 0.0
    %1113 = vmatprep.subr.mxu0 0.0
    %1114 = vmatpush1.msra.mxu0 0.0
    %1115 = vmatprep.subr.mxu0 0.0
    %1116 = vmatpush1.msra.mxu0 0.0
    %1117 = vmatprep.subr.mxu0 0.0
    %1118 = vmatpush1.msra.mxu0 0.0
    %1119 = vmatprep.subr.mxu0 0.0
    %1120 = vmatpush1.msra.mxu0 0.0
    %1121 = vmatprep.subr.mxu0 0.0
    %1122 = vmatpush1.msra.mxu0 0.0
    %1123 = vmatprep.subr.mxu0 0.0
    %1124 = vmatpush1.msra.mxu0 0.0
    %1125 = vmatprep.subr.mxu0 0.0
    %1126 = vmatpush1.msra.mxu0 0.0
    %1127 = vmatprep.subr.mxu0 0.0
    %1128 = vmatpush1.msra.mxu0 0.0
    %1129 = vmatprep.mubr.f32.mxu0 0.0
    %1130 = vmatmul.mubr.f32.gmra.mrb[0].mxu0 %v1063
    %v1131 = vpop.f32.mrb[0].mxu0
    %v1132 = vadd.f32 0.0, %v1131
    %v1133 = vpop.f32.mrb[0].mxu0
    %1134 = vdwg.mxu0
    %v1135 = vadd.f32 %v894, %v1132
    %1136 = vst.msk [vmem:[#allocation8 + $0x8] sm:$0xff] %vm75, %v1135
    // Predicated region
    $region34: #{tpu_custom_call.1} parent=1 // pred_check
      _
    $region35: #{tpu_custom_call.1} parent=1 // pred_check_branch
      %1138 = sbr.rel (0) target = $region37
    $region36: #{tpu_custom_call.1} parent=1 // pred_region
      %s1140 = ssub.s32 256, 256
      %1141 = vsyncadd [#allocation4], %s1140
      %s1142 = sshll.u32 [#allocation8], 4
      %s1143 = int_to_ptr.vmem [resolvable:$true] %s1142
      %1148 = dma.vmem_to_hbm [thread:$0]  %s1143, 256, %s5, [#allocation4], 128, 128, 8
    $region37: #{tpu_custom_call.1} parent=1 // pred_fallthru
      _
    // Predicated region
    $region38: #{tpu_custom_call.1} parent=1 // pred_check
      _
    $region39: #{tpu_custom_call.1} parent=1 // pred_check_branch
      %1150 = sbr.rel (0) target = $region41
    $region40: #{tpu_custom_call.1} parent=1 // pred_region
      %1151 = dma.done [#allocation4], 256
    $region41: #{tpu_custom_call.1} parent=1 // pred_fallthru
      _
    %1152 = vsyncpa [#allocation3], 1
    %1153 = vsyncpa [#allocation6], 1
    %1154 = vsyncpa [#allocation4], 1

</llo_original>
